<compile_context>
chip_gen: v7x
topology: tpu7x:2x2x1
jax: 0.10.0
libtpu: 0.0.40
codegen_flags: <defaults>
</compile_context>

<pallas_src>
import functools

import jax
import jax.numpy as jnp
import numpy as np
from jax.experimental import pallas as pl
from jax.experimental.pallas import tpu as pltpu


def _cdiv(a, b):
    return -(-a // b)


def _round_up(a, m):
    return _cdiv(a, m) * m


def _padded_vmem_bytes(shape, dtype):
    """Approx. VMEM footprint of one buffer, including (8,128)-tile padding."""
    itemsize = jnp.dtype(dtype).itemsize
    packing = max(1, 4 // itemsize)              # sublane packing of sub-32-bit dtypes
    dims = list(shape) if len(shape) >= 2 else [1] + list(shape)
    lane = _round_up(dims[-1], 128)
    sub = _round_up(dims[-2], 8 * packing)
    lead = 1
    for d in dims[:-2]:
        lead *= int(d)
    return lead * sub * lane * itemsize


# ----------------------------------------------------------------------------
# Kernel 1: small-vocabulary MXU one-hot gather (typical FM/DCN field_dims).
# ----------------------------------------------------------------------------
def _one_hot_kernel(idx_ref, tbl_ref, out_ref, *, n_split):
    """idx_ref: VMEM (T, 1) int32; tbl_ref: VMEM (n_split, V, D) bf16;
    out_ref: VMEM (T, D).  out[t] = sum_c tbl[c, idx[t], :] (exact f32 rebuild)."""
    idx = idx_ref[...]                                        # (T, 1) int32
    T = idx.shape[0]
    V = tbl_ref.shape[1]
    D = tbl_ref.shape[2]

    iota = jax.lax.broadcasted_iota(jnp.int32, (T, V), 1)
    onehot = (idx == iota).astype(jnp.bfloat16)               # exactly one 1.0 per row

    acc = jnp.zeros((T, D), jnp.float32)
    for c in range(n_split):                                  # static, <= 3
        acc = acc + jnp.dot(onehot, tbl_ref[c],
                            preferred_element_type=jnp.float32)
    out_ref[...] = acc.astype(out_ref.dtype)


# ----------------------------------------------------------------------------
# Kernel 2: fallback row gather (vocab too large for one-hot, table fits VMEM).
# ----------------------------------------------------------------------------
def _gather_rows_kernel(idx_ref, emb_ref, out_ref, *, group):
    """idx_ref: SMEM (T,) int32 (this step's window); emb_ref: VMEM (V, D)
    resident table; out_ref: VMEM (T, D).  fori_loop over 8-row groups."""
    n_groups = out_ref.shape[0] // group

    def body(g, carry):
        base = pl.multiple_of(g * group, group)
        rows = [emb_ref[pl.ds(idx_ref[base + j], 1), :] for j in range(group)]
        out_ref[pl.ds(base, group), :] = jnp.concatenate(rows, axis=0)
        return carry

    jax.lax.fori_loop(0, n_groups, body, 0, unroll=4)


# ----------------------------------------------------------------------------
# Wrapper.
# ----------------------------------------------------------------------------
def features_embedding_forward(x, emb_table, offsets, *,
                               rows_per_step=1024,
                               one_hot_max_vocab=4096):
    """x: (B, F) int32, emb_table: (V, D) float, offsets: (F,) int32 -> (B, F, D)."""
    B, F = x.shape
    V, D = emb_table.shape
    out_dtype = emb_table.dtype
    itemsize = jnp.dtype(out_dtype).itemsize

    # Fold per-field offsets into the indices once, in XLA.
    idx = (x.astype(jnp.int32) + offsets.astype(jnp.int32)[None, :]).reshape(-1)
    total = B * F

    use_one_hot = V <= one_hot_max_vocab

    # ---- tile-size selection ------------------------------------------------
    t = int(rows_per_step)
    if use_one_hot:
        # keep the (tile_rows, V) bf16 one-hot intermediate around ~2 MiB
        t = min(t, max(64, (1 << 20) // max(V, 1)))
    # keep >= 2 grid steps when possible so "parallel" can shard across v7x's 2 TCs
    t = min(t, _round_up(_cdiv(total, 2), 8))
    tile_rows = max(8, _round_up(min(t, total), 8))
    n_steps = _cdiv(total, tile_rows)
    n_rows = n_steps * tile_rows

    idx = jnp.pad(idx, (0, n_rows - total))      # padded rows gather row 0 (discarded)

    # ---- VMEM budget (padded footprints, 2 pipeline buffers per operand) ----
    try:
        vmem_cap = int(pltpu.get_tpu_info().vmem_capacity_bytes)
    except Exception:
        vmem_cap = 64 * 1024 * 1024              # conservative: v7x per-TC VMEM
    vmem_budget = (vmem_cap * 5) // 8            # ~40 MiB on v7x, ~80 MiB on v5e/v6e

    if use_one_hot:
        # Exact 3-way bf16 split of the f32 table (t0 + t1 + t2 == table bit-exactly),
        # so bf16 MXU matmuls with f32 accumulation reproduce the f32 rows exactly.
        if emb_table.dtype == jnp.float32:
            parts, resid = [], emb_table
            for _ in range(3):
                p = resid.astype(jnp.bfloat16)
                parts.append(p)
                resid = resid - p.astype(jnp.float32)
            tbl = jnp.stack(parts)                               # (3, V, D) bf16
        else:
            tbl = emb_table.astype(jnp.bfloat16)[None]           # (1, V, D)
        n_split = tbl.shape[0]

        idx2 = idx.reshape(n_rows, 1)

        need = 2 * (_padded_vmem_bytes(tbl.shape, tbl.dtype)
                    + _padded_vmem_bytes((tile_rows, 1), jnp.int32)
                    + _padded_vmem_bytes((tile_rows, D), out_dtype)) + (4 << 20)
        vmem_limit = int(min(vmem_budget, max(16 << 20, need)))

        out = pl.pallas_call(
            functools.partial(_one_hot_kernel, n_split=n_split),
            out_shape=jax.ShapeDtypeStruct((n_rows, D), out_dtype),
            grid=(n_steps,),
            in_specs=[
                # per-step window of indices (scales with B*F, pipelined)
                pl.BlockSpec((tile_rows, 1), lambda i: (i, 0)),
                # full split table, constant block index -> resident in VMEM
                pl.BlockSpec((n_split, V, D), lambda i: (0, 0, 0)),
            ],
            out_specs=pl.BlockSpec((tile_rows, D), lambda i: (i, 0)),
            compiler_params=pltpu.CompilerParams(
                dimension_semantics=("parallel",),
                vmem_limit_bytes=vmem_limit),
            cost_estimate=pl.CostEstimate(
                flops=2 * n_split * n_rows * V * D,
                transcendentals=0,
                bytes_accessed=int(tbl.size * 2 + n_rows * 4
                                   + n_rows * D * itemsize)),
        )(idx2, tbl)
    else:
        # TODO(synk): tables whose (double-buffered, lane-padded) footprint exceeds
        # the VMEM budget need an HBM-side DMA row gather (memory_space=pl.ANY +
        # pltpu.make_async_copy); not implemented here.
        need = 2 * (_padded_vmem_bytes((V, D), emb_table.dtype)
                    + _padded_vmem_bytes((tile_rows, D), out_dtype)) + (4 << 20)
        vmem_limit = int(min(vmem_budget, max(16 << 20, need)))

        out = pl.pallas_call(
            functools.partial(_gather_rows_kernel, group=8),
            out_shape=jax.ShapeDtypeStruct((n_rows, D), out_dtype),
            grid=(n_steps,),
            in_specs=[
                # windowed SMEM delivery of this step's indices (no whole-array prefetch)
                pl.BlockSpec((tile_rows,), lambda i: (i,),
                             memory_space=pltpu.MemorySpace.SMEM),
                # full table, constant block index -> resident in VMEM
                pl.BlockSpec((V, D), lambda i: (0, 0)),
            ],
            out_specs=pl.BlockSpec((tile_rows, D), lambda i: (i, 0)),
            compiler_params=pltpu.CompilerParams(
                dimension_semantics=("parallel",),
                vmem_limit_bytes=vmem_limit),
            cost_estimate=pl.CostEstimate(
                flops=0, transcendentals=0,
                bytes_accessed=int(V * D * itemsize + n_rows * 4
                                   + n_rows * D * itemsize)),
        )(idx, emb_table)

    # Drop padding, restore (B, F, D).
    return out[:total].reshape(B, F, D)


def make_params(field_dims, embed_dim, key):
    """Deterministic xavier_uniform init of the embedding table + offsets."""
    vocab = int(np.sum(field_dims))
    bound = float(np.sqrt(6.0 / (vocab + embed_dim)))
    emb_table = jax.random.uniform(
        key, (vocab, embed_dim), dtype=jnp.float32, minval=-bound, maxval=bound)
    offsets = jnp.array(
        np.concatenate([[0], np.cumsum(field_dims)[:-1]]).astype(np.int32))
    return emb_table, offsets


if __name__ == "__main__":
    field_dims = np.array([3, 4, 5, 6], dtype=np.int64)   # num_fields = 4, vocab = 18
    embed_dim = 16
    batch = 8
    F = len(field_dims)

    key = jax.random.PRNGKey(0)
    k_emb, k_x = jax.random.split(key)
    emb_table, offsets = make_params(field_dims, embed_dim, k_emb)

    # Per-field indices in [0, field_dims[f]).
    cols = []
    for f in range(F):
        k_x, kf = jax.random.split(k_x)
        cols.append(jax.random.randint(kf, (batch,), 0, int(field_dims[f]),
                                       dtype=jnp.int32))
    x = jnp.stack(cols, axis=1)  # (batch, num_fields) int32

    out = features_embedding_forward(x, emb_table, offsets)
    out = jax.block_until_ready(out)

    # Pure-JAX reference: embedding(x + offsets).  Exact match expected: the MXU
    # path rebuilds each f32 row from its exact 3-way bf16 split.
    ref = jnp.take(emb_table, x + offsets[None, :], axis=0)
    assert out.shape == (batch, F, embed_dim)
    assert out.dtype == emb_table.dtype
    np.testing.assert_allclose(np.asarray(out), np.asarray(ref), rtol=0, atol=0)

    print("KERNEL_OK")
</pallas_src>

<mosaic_0001>
module attributes {stable_mosaic.version = 11 : i64} {
  func.func @_one_hot_kernel(%arg0: i32, %arg1: memref<16x1xi32, #tpu.memory_space<vmem>>, %arg2: memref<3x18x16xbf16, #tpu.memory_space<vmem>>, %arg3: memref<16x16xf32, #tpu.memory_space<vmem>>) attributes {dimension_semantics = [#tpu.dimension_semantics<parallel>], iteration_bounds = array<i64: 2>, scalar_prefetch = 0 : i64, scratch_operands = 0 : i64, tpu.core_type = #tpu.core_type<tc>, window_params = [{transform_indices = @transform_0, window_bounds = array<i64: 16, 1>}, {pipeline_mode = #tpu.pipeline_mode<synchronous>, transform_indices = @transform_1, window_bounds = array<i64: 3, 18, 16>}, {transform_indices = @transform_2, window_bounds = array<i64: 16, 16>}]} {
    %c0 = arith.constant 0 : index
    %c0_0 = arith.constant 0 : index
    %0 = vector.load %arg1[%c0, %c0_0] : memref<16x1xi32, #tpu.memory_space<vmem>>, vector<16x1xi32>
    %1 = tpu.iota {dimensions = array<i32: 1>} : vector<16x18xi32>
    %2 = vector.broadcast %0 : vector<16x1xi32> to vector<16x18xi32>
    %3 = arith.cmpi eq, %2, %1 : vector<16x18xi32>
    %4 = arith.extui %3 : vector<16x18xi1> to vector<16x18xi32>
    %5 = arith.sitofp %4 : vector<16x18xi32> to vector<16x18xf32>
    %6 = arith.truncf %5 : vector<16x18xf32> to vector<16x18xbf16>
    %cst = arith.constant 0.000000e+00 : f32
    %7 = vector.broadcast %cst : f32 to vector<16x16xf32>
    %c0_1 = arith.constant 0 : index
    %c0_2 = arith.constant 0 : index
    %c0_3 = arith.constant 0 : index
    %8 = vector.load %arg2[%c0_1, %c0_2, %c0_3] : memref<3x18x16xbf16, #tpu.memory_space<vmem>>, vector<1x18x16xbf16>
    %9 = vector.shape_cast %8 : vector<1x18x16xbf16> to vector<18x16xbf16>
    %cst_4 = arith.constant dense<0.000000e+00> : vector<16x16xf32>
    %10 = tpu.matmul %6, %9, %cst_4 {dimension_numbers = #tpu.dot_dimension_numbers<[1], [0], [0], [1], [0, 0, 1, 1], [], []>} : vector<16x18xbf16>, vector<18x16xbf16>, vector<16x16xf32> -> vector<16x16xf32>
    %11 = arith.addf %7, %10 : vector<16x16xf32>
    %c1 = arith.constant 1 : index
    %c0_5 = arith.constant 0 : index
    %c0_6 = arith.constant 0 : index
    %12 = vector.load %arg2[%c1, %c0_5, %c0_6] : memref<3x18x16xbf16, #tpu.memory_space<vmem>>, vector<1x18x16xbf16>
    %13 = vector.shape_cast %12 : vector<1x18x16xbf16> to vector<18x16xbf16>
    %cst_7 = arith.constant dense<0.000000e+00> : vector<16x16xf32>
    %14 = tpu.matmul %6, %13, %cst_7 {dimension_numbers = #tpu.dot_dimension_numbers<[1], [0], [0], [1], [0, 0, 1, 1], [], []>} : vector<16x18xbf16>, vector<18x16xbf16>, vector<16x16xf32> -> vector<16x16xf32>
    %15 = arith.addf %11, %14 : vector<16x16xf32>
    %c2 = arith.constant 2 : index
    %c0_8 = arith.constant 0 : index
    %c0_9 = arith.constant 0 : index
    %16 = vector.load %arg2[%c2, %c0_8, %c0_9] : memref<3x18x16xbf16, #tpu.memory_space<vmem>>, vector<1x18x16xbf16>
    %17 = vector.shape_cast %16 : vector<1x18x16xbf16> to vector<18x16xbf16>
    %cst_10 = arith.constant dense<0.000000e+00> : vector<16x16xf32>
    %18 = tpu.matmul %6, %17, %cst_10 {dimension_numbers = #tpu.dot_dimension_numbers<[1], [0], [0], [1], [0, 0, 1, 1], [], []>} : vector<16x18xbf16>, vector<18x16xbf16>, vector<16x16xf32> -> vector<16x16xf32>
    %19 = arith.addf %15, %18 : vector<16x16xf32>
    %c0_11 = arith.constant 0 : index
    %c0_12 = arith.constant 0 : index
    %20 = vector.load %arg3[%c0_11, %c0_12] : memref<16x16xf32, #tpu.memory_space<vmem>>, vector<16x16xf32>
    tpu.vector_store %arg3[%c0_11, %c0_12], %19 {strides = array<i32>} : memref<16x16xf32, #tpu.memory_space<vmem>>, vector<16x16xf32>,
    return
  }
  func.func @transform_0(%arg0: i32) -> (i32, i32) {
    %c0_i32 = arith.constant 0 : i32
    %c0_i32_0 = arith.constant 0 : i32
    return %arg0, %c0_i32 : i32, i32
  }
  func.func @transform_1(%arg0: i32) -> (i32, i32, i32) {
    %c0_i32 = arith.constant 0 : i32
    %c0_i32_0 = arith.constant 0 : i32
    %c0_i32_1 = arith.constant 0 : i32
    %c0_i32_2 = arith.constant 0 : i32
    return %c0_i32, %c0_i32_0, %c0_i32_1 : i32, i32, i32
  }
  func.func @transform_2(%arg0: i32) -> (i32, i32) {
    %c0_i32 = arith.constant 0 : i32
    %c0_i32_0 = arith.constant 0 : i32
    return %arg0, %c0_i32 : i32, i32
  }
}

</mosaic_0001>

<llo_original>
// kernel: tpu_custom_call.1
$region0: #{tpu_custom_call.1}
  #allocation0 [shape = 'u32[]', space=smem, size = 0x4, offset = 0x4, fixed_abs, tag = 'smem constant byte address 0x4 - core index']
  #allocation1 [shape = 'u32[144,128]{1,0:T(1,128)}', space=vmem, size = 0x12000, scoped, tag = 'internal scratch']
  %s0 = inlined_call_operand.vmem [shape: s32[32,1], index: 0, kind: input, shape index: {}]
  %s1 = inlined_call_operand.vmem [shape: bf16[3,18,16], index: 1, kind: input, shape index: {}]
  %s2 = inlined_call_operand.vmem [shape: f32[32,16], index: 2, kind: output, shape index: {}]
  %s3 = sld [smem:[#allocation0]]
  $region41: #{tpu_custom_call.1} parent=0
    _
  %s5 = ssub.s32 1, %s3
  %s6 = scalar_select 0, %s5, %s3
  loop: start=0, step=1, limit=4
  $region2: #{tpu_custom_call.1} parent=0 // loop_pre_header
    _
  $region3: #{tpu_custom_call.1} parent=0 // loop_header
    %s8 = sphi 0, %s12
    %p9 = scmp.ge.s32.totalorder %s8, 4
    %s18 = sphi 0, %s20
    %s21 = sphi 0, %s18
    %s22 = sphi 0, %s21
    %s38 = sphi 0, %s22
    %s42 = sphi 0, %s42
    %s44 = sphi 0, %s42
    %s45 = sphi 0, %s44
    %s59 = sphi 0, %s45
    %s65 = sphi 0, %s67
    %s68 = sphi 0, %s65
    %s69 = sphi 0, %s68
    %s85 = sphi 0, %s69
  $region4: #{tpu_custom_call.1} parent=0 // loop_header_branch
    %11 = sbr.rel (%p9) target = $region8
  $region5: #{tpu_custom_call.1} parent=0 // loop_body
    %s13 = ssub.s32 %s8, 1
    %s14 = ssub.s32 %s8, 2
    %s15 = sadd.s32 %s8, 1
    %s16 = ssub.s32 %s8, %s15
    %p17 = scmp.eq.s32.totalorder %s16, 0
    %s19 = sadd.s32 %s18, 1
    %s20 = scalar_select %p17, %s18, %s19
    %p23 = pneg %p17
    %p24 = scmp.eq.s32.totalorder %s8, 1
    %p25 = por %p23, %p24
    %p26 = scmp.ne.s32.totalorder %s18, %s21
    %p27 = scmp.eq.s32.totalorder %s8, 0
    %p28 = por %p26, %p27
    %p29 = scmp.ne.s32.totalorder %s18, %s21
    %p30 = scmp.eq.s32.totalorder %s13, 1
    %p31 = por %p29, %p30
    %p32 = scmp.ne.s32.totalorder %s21, %s22
    %p33 = scmp.eq.s32.totalorder %s13, 0
    %p34 = por %p32, %p33
    %p35 = scmp.ne.s32.totalorder %s21, %s22
    %p36 = scmp.eq.s32.totalorder %s14, 1
    %p37 = por %p35, %p36
    %p39 = scmp.ne.s32.totalorder %s22, %s38
    %p40 = scmp.eq.s32.totalorder %s14, 0
    %p41 = por %p39, %p40
    %s43 = sadd.s32 %s42, 1
    %p46 = scmp.eq.s32.totalorder %s8, 1
    %p47 = scmp.ne.s32.totalorder %s42, %s44
    %p48 = scmp.eq.s32.totalorder %s8, 0
    %p49 = por %p47, %p48
    %p50 = scmp.ne.s32.totalorder %s42, %s44
    %p51 = scmp.eq.s32.totalorder %s13, 1
    %p52 = por %p50, %p51
    %p53 = scmp.ne.s32.totalorder %s44, %s45
    %p54 = scmp.eq.s32.totalorder %s13, 0
    %p55 = por %p53, %p54
    %p56 = scmp.ne.s32.totalorder %s44, %s45
    %p57 = scmp.eq.s32.totalorder %s14, 1
    %p58 = por %p56, %p57
    %p60 = scmp.ne.s32.totalorder %s45, %s59
    %p61 = scmp.eq.s32.totalorder %s14, 0
    %p62 = por %p60, %p61
    %s63 = ssub.s32 %s8, %s15
    %p64 = scmp.eq.s32.totalorder %s63, 0
    %s66 = sadd.s32 %s65, 1
    %s67 = scalar_select %p64, %s65, %s66
    %p70 = pneg %p64
    %p71 = scmp.eq.s32.totalorder %s8, 1
    %p72 = por %p70, %p71
    %p73 = scmp.ne.s32.totalorder %s65, %s68
    %p74 = scmp.eq.s32.totalorder %s8, 0
    %p75 = por %p73, %p74
    %p76 = scmp.ne.s32.totalorder %s65, %s68
    %p77 = scmp.eq.s32.totalorder %s13, 1
    %p78 = por %p76, %p77
    %p79 = scmp.ne.s32.totalorder %s68, %s69
    %p80 = scmp.eq.s32.totalorder %s13, 0
    %p81 = por %p79, %p80
    %p82 = scmp.ne.s32.totalorder %s68, %s69
    %p83 = scmp.eq.s32.totalorder %s14, 1
    %p84 = por %p82, %p83
    %p86 = scmp.ne.s32.totalorder %s69, %s85
    %p87 = scmp.eq.s32.totalorder %s14, 0
    %p88 = por %p86, %p87
    %p89 = scmp.le.s32.totalorder 1, %s8
    %p90 = scmp.lt.s32.totalorder %s8, 3
    %p91 = pnand %p89, %p90
    %p92 = pneg %p91
    // Predicated region
    $region9: #{tpu_custom_call.1} parent=5 // pred_check
      _
    $region10: #{tpu_custom_call.1} parent=5 // pred_check_branch
      %94 = sbr.rel (%p91) target = $region12
    $region11: #{tpu_custom_call.1} parent=5 // pred_region
      %s95 = ssub.s32 %s8, 1
      // Predicated region
      $region13: #{tpu_custom_call.1} parent=11 // pred_check
        %p96 = pneg %p55
      $region14: #{tpu_custom_call.1} parent=11 // pred_check_branch
        %98 = sbr.rel (%p96) target = $region16
      $region15: #{tpu_custom_call.1} parent=11 // pred_region
        _
      $region16: #{tpu_custom_call.1} parent=11 // pred_fallthru
        _
    $region12: #{tpu_custom_call.1} parent=5 // pred_fallthru
      _
    %p99 = scmp.lt.s32.totalorder %s8, 2
    // Predicated region
    $region17: #{tpu_custom_call.1} parent=5 // pred_check
      %p100 = pneg %p99
    $region18: #{tpu_custom_call.1} parent=5 // pred_check_branch
      %102 = sbr.rel (%p100) target = $region20
    $region19: #{tpu_custom_call.1} parent=5 // pred_region
      // Predicated region
      $region21: #{tpu_custom_call.1} parent=19 // pred_check
        %p103 = pneg %p28
      $region22: #{tpu_custom_call.1} parent=19 // pred_check_branch
        %105 = sbr.rel (%p103) target = $region24
      $region23: #{tpu_custom_call.1} parent=19 // pred_region
        %s106 = smul.u32 2, %s8
        %p107 = scmp.lt.s32.totalorder %s106, 3
        %s108 = scalar_select %p107, %s106, 3
        %s109 = smul.addr %s108, 8
        %s110 = scalar_lea.vmem %s0, %s109
        %s111 = smul.u32 2, %s8
      $region24: #{tpu_custom_call.1} parent=19 // pred_fallthru
        _
    $region20: #{tpu_custom_call.1} parent=5 // pred_fallthru
      _
    %p112 = scmp.le.s32.totalorder 1, %s8
    %p113 = scmp.lt.s32.totalorder %s8, 3
    %p114 = pnand %p112, %p113
    %p115 = pneg %p114
    // Predicated region
    $region25: #{tpu_custom_call.1} parent=5 // pred_check
      _
    $region26: #{tpu_custom_call.1} parent=5 // pred_check_branch
      %117 = sbr.rel (%p114) target = $region28
    $region27: #{tpu_custom_call.1} parent=5 // pred_region
      %s118 = ssub.s32 %s8, 1
      %s119 = smul.u32 2, %s13
      %p120 = scmp.lt.s32.totalorder %s119, 3
      %s121 = scalar_select %p120, %s119, 3
      %s122 = smul.addr %s121, 8
      %s123 = scalar_lea.vmem %s0, %s122
      %p124 = pneg %p34
      %p125 = pneg %p31
      %p126 = pneg %p55
      %p127 = pneg %p52
      %p128 = pneg %p81
      %p129 = pneg %p78
      %s130 = smul.u32 2, %s13
      %p131 = scmp.lt.s32.totalorder %s130, 3
      %s132 = scalar_select %p131, %s130, 3
      %s133 = smul.addr %s132, 8
      %s134 = scalar_lea.vmem %s2, %s133
      %s135 = smul.u32 2, %s13
      %p136 = scmp.lt.s32.totalorder %s135, 3
      %s137 = scalar_select %p136, %s135, 3
      %s138 = smul.addr %s137, 8
      %s139 = scalar_lea.vmem %s0, %s138
      %s140 = smul.u32 2, %s13
      %s141 = smul.u32 2, %s13
      %p142 = scmp.lt.s32.totalorder %s141, 3
      %s143 = scalar_select %p142, %s141, 3
      %s144 = smul.addr %s143, 8
      %s145 = scalar_lea.vmem %s2, %s144
      %s146 = smul.u32 2, %s13
      %v148 = vld [vmem:[%s139] sm:$0xff]
      %v149 = vld [vmem:[%s139 + $0x8] sm:$0xff]
      %v150 = vlaneseq
      %v151 = vand.u32 %v150, 127
      %152 = vset.pattern.permute.xlu0 0
      %153 = vperm.xlu0 %152, %v148
      %v154 = vpop.permute.xlu0 %153
      %155 = vset.pattern.permute.xlu0 0
      %156 = vperm.xlu0 %155, %v149
      %v157 = vpop.permute.xlu0 %156
      %vm158 = vcmp.eq.s32.totalorder %v154, %v151
      %vm159 = vcmp.eq.s32.totalorder %v157, %v151
      %v160 = vsel %vm158, 1, 0
      %v161 = vsel %vm159, 1, 0
      %v162 = vcvt.s32.f32 %v160
      %v163 = vcvt.s32.f32 %v161
      %v164 = vpack.c.bf16 %v163, %v162
      %v165 = vld [vmem:[%s1] sm:$0xf]
      %v166 = vld [vmem:[%s1 + $0x4] sm:$0xf]
      %v167 = vld [vmem:[%s1 + $0x8] sm:$0x1]
      %s168 = scalar_lea.vmem %s1, 12
      %v169 = vld [vmem:[%s168] sm:$0xf]
      %v170 = vld [vmem:[%s168 + $0x4] sm:$0xf]
      %v171 = vld [vmem:[%s168 + $0x8] sm:$0x1]
      %v175 = vunpack.c.l.b16 %v169
      %v176 = vunpack.c.l.b16 %v170
      %v177 = vunpack.c.l.b16 %v171
      %v178 = vpack.c.b16 %v176, %v175
      %v179 = vpack.c.b16 %v177, %v177
      %vm181 = vcmask 146432
      %v183 = vsel %vm181, %v164, 0
      %vm185 = vcmask 1040384
      %v187 = vsel %vm185, %v179, 0
      %189 = vmatprep.subr.bf16.mxu0 0
      %190 = vmatpush1.bf16.msra.mxu0 %v178
      %191 = vmatprep.subr.bf16.mxu0 0
      %192 = vmatpush1.bf16.msra.mxu0 %v187
      %193 = vmatprep.subr.bf16.mxu0 0
      %194 = vmatpush1.bf16.msra.mxu0 0
      %195 = vmatprep.subr.bf16.mxu0 0
      %196 = vmatpush1.bf16.msra.mxu0 0
      %197 = vmatprep.subr.bf16.mxu0 0
      %198 = vmatpush1.bf16.msra.mxu0 0
      %199 = vmatprep.subr.bf16.mxu0 0
      %200 = vmatpush1.bf16.msra.mxu0 0
      %201 = vmatprep.subr.bf16.mxu0 0
      %202 = vmatpush1.bf16.msra.mxu0 0
      %203 = vmatprep.subr.bf16.mxu0 0
      %204 = vmatpush1.bf16.msra.mxu0 0
      %205 = vmatprep.subr.bf16.mxu0 0
      %206 = vmatpush1.bf16.msra.mxu0 0
      %207 = vmatprep.subr.bf16.mxu0 0
      %208 = vmatpush1.bf16.msra.mxu0 0
      %209 = vmatprep.subr.bf16.mxu0 0
      %210 = vmatpush1.bf16.msra.mxu0 0
      %211 = vmatprep.subr.bf16.mxu0 0
      %212 = vmatpush1.bf16.msra.mxu0 0
      %213 = vmatprep.subr.bf16.mxu0 0
      %214 = vmatpush1.bf16.msra.mxu0 0
      %215 = vmatprep.subr.bf16.mxu0 0
      %216 = vmatpush1.bf16.msra.mxu0 0
      %217 = vmatprep.subr.bf16.mxu0 0
      %218 = vmatpush1.bf16.msra.mxu0 0
      %219 = vmatprep.subr.bf16.mxu0 0
      %220 = vmatpush1.bf16.msra.mxu0 0
      %221 = vmatprep.mubr.bf16.mxu0 0
      %222 = vmatmul.mubr.bf16.gmra.mrb[0].mxu0 %v183
      %v223 = vpop.f32.mrb[0].mxu0
      %v224 = vadd.f32 0.0, %v223
      %v225 = vpop.f32.mrb[0].mxu0
      %v226 = vpop.f32.mrb[0].mxu0
      %v227 = vadd.f32 0.0, %v226
      %v228 = vpop.f32.mrb[0].mxu0
      %229 = vdwg.mxu0
      %v233 = vunpack.c.l.b16 %v165
      %v234 = vunpack.c.l.b16 %v166
      %v235 = vunpack.c.l.b16 %v167
      %v236 = vpack.c.b16 %v234, %v233
      %v237 = vpack.c.b16 %v235, %v235
      %v240 = vsel %vm185, %v237, 0
      %242 = vmatprep.subr.bf16.mxu0 0
      %243 = vmatpush1.bf16.msra.mxu0 %v236
      %244 = vmatprep.subr.bf16.mxu0 0
      %245 = vmatpush1.bf16.msra.mxu0 %v240
      %246 = vmatprep.subr.bf16.mxu0 0
      %247 = vmatpush1.bf16.msra.mxu0 0
      %248 = vmatprep.subr.bf16.mxu0 0
      %249 = vmatpush1.bf16.msra.mxu0 0
      %250 = vmatprep.subr.bf16.mxu0 0
      %251 = vmatpush1.bf16.msra.mxu0 0
      %252 = vmatprep.subr.bf16.mxu0 0
      %253 = vmatpush1.bf16.msra.mxu0 0
      %254 = vmatprep.subr.bf16.mxu0 0
      %255 = vmatpush1.bf16.msra.mxu0 0
      %256 = vmatprep.subr.bf16.mxu0 0
      %257 = vmatpush1.bf16.msra.mxu0 0
      %258 = vmatprep.subr.bf16.mxu0 0
      %259 = vmatpush1.bf16.msra.mxu0 0
      %260 = vmatprep.subr.bf16.mxu0 0
      %261 = vmatpush1.bf16.msra.mxu0 0
      %262 = vmatprep.subr.bf16.mxu0 0
      %263 = vmatpush1.bf16.msra.mxu0 0
      %264 = vmatprep.subr.bf16.mxu0 0
      %265 = vmatpush1.bf16.msra.mxu0 0
      %266 = vmatprep.subr.bf16.mxu0 0
      %267 = vmatpush1.bf16.msra.mxu0 0
      %268 = vmatprep.subr.bf16.mxu0 0
      %269 = vmatpush1.bf16.msra.mxu0 0
      %270 = vmatprep.subr.bf16.mxu0 0
      %271 = vmatpush1.bf16.msra.mxu0 0
      %272 = vmatprep.subr.bf16.mxu0 0
      %273 = vmatpush1.bf16.msra.mxu0 0
      %274 = vmatprep.mubr.bf16.mxu0 0
      %275 = vmatmul.mubr.bf16.gmra.mrb[0].mxu0 %v183
      %v276 = vpop.f32.mrb[0].mxu0
      %v277 = vadd.f32 %v224, %v276
      %v278 = vpop.f32.mrb[0].mxu0
      %v279 = vpop.f32.mrb[0].mxu0
      %v280 = vadd.f32 %v227, %v279
      %v281 = vpop.f32.mrb[0].mxu0
      %282 = vdwg.mxu0
      %s283 = scalar_lea.vmem %s1, 24
      %v284 = vld [vmem:[%s283] sm:$0xf]
      %v285 = vld [vmem:[%s283 + $0x4] sm:$0xf]
      %v286 = vld [vmem:[%s283 + $0x8] sm:$0x1]
      %v290 = vunpack.c.l.b16 %v284
      %v291 = vunpack.c.l.b16 %v285
      %v292 = vunpack.c.l.b16 %v286
      %v293 = vpack.c.b16 %v291, %v290
      %v294 = vpack.c.b16 %v292, %v292
      %v297 = vsel %vm185, %v294, 0
      %299 = vmatprep.subr.bf16.mxu0 0
      %300 = vmatpush1.bf16.msra.mxu0 %v293
      %301 = vmatprep.subr.bf16.mxu0 0
      %302 = vmatpush1.bf16.msra.mxu0 %v297
      %303 = vmatprep.subr.bf16.mxu0 0
      %304 = vmatpush1.bf16.msra.mxu0 0
      %305 = vmatprep.subr.bf16.mxu0 0
      %306 = vmatpush1.bf16.msra.mxu0 0
      %307 = vmatprep.subr.bf16.mxu0 0
      %308 = vmatpush1.bf16.msra.mxu0 0
      %309 = vmatprep.subr.bf16.mxu0 0
      %310 = vmatpush1.bf16.msra.mxu0 0
      %311 = vmatprep.subr.bf16.mxu0 0
      %312 = vmatpush1.bf16.msra.mxu0 0
      %313 = vmatprep.subr.bf16.mxu0 0
      %314 = vmatpush1.bf16.msra.mxu0 0
      %315 = vmatprep.subr.bf16.mxu0 0
      %316 = vmatpush1.bf16.msra.mxu0 0
      %317 = vmatprep.subr.bf16.mxu0 0
      %318 = vmatpush1.bf16.msra.mxu0 0
      %319 = vmatprep.subr.bf16.mxu0 0
      %320 = vmatpush1.bf16.msra.mxu0 0
      %321 = vmatprep.subr.bf16.mxu0 0
      %322 = vmatpush1.bf16.msra.mxu0 0
      %323 = vmatprep.subr.bf16.mxu0 0
      %324 = vmatpush1.bf16.msra.mxu0 0
      %325 = vmatprep.subr.bf16.mxu0 0
      %326 = vmatpush1.bf16.msra.mxu0 0
      %327 = vmatprep.subr.bf16.mxu0 0
      %328 = vmatpush1.bf16.msra.mxu0 0
      %329 = vmatprep.subr.bf16.mxu0 0
      %330 = vmatpush1.bf16.msra.mxu0 0
      %331 = vmatprep.mubr.bf16.mxu0 0
      %332 = vmatmul.mubr.bf16.gmra.mrb[0].mxu0 %v183
      %v333 = vpop.f32.mrb[0].mxu0
      %v334 = vadd.f32 0.0, %v333
      %v335 = vpop.f32.mrb[0].mxu0
      %v336 = vpop.f32.mrb[0].mxu0
      %v337 = vadd.f32 0.0, %v336
      %v338 = vpop.f32.mrb[0].mxu0
      %339 = vdwg.mxu0
      %v340 = vadd.f32 %v277, %v334
      %v341 = vadd.f32 %v280, %v337
      %vm342 = vcmask 130048
      %343 = vst.msk [vmem:[%s145] sm:$0xff] %vm342, %v340
      %344 = vst.msk [vmem:[%s145 + $0x8] sm:$0xff] %vm342, %v341
      %s345 = smul.u32 2, %s13
      %p346 = scmp.lt.s32.totalorder %s345, 3
      %s347 = scalar_select %p346, %s345, 3
      %s348 = smul.addr %s347, 8
      %s349 = scalar_lea.vmem %s2, %s348
      // Predicated region
      $region29: #{tpu_custom_call.1} parent=27 // pred_check
        %p350 = pneg %p78
      $region30: #{tpu_custom_call.1} parent=27 // pred_check_branch
        %352 = sbr.rel (%p350) target = $region32
      $region31: #{tpu_custom_call.1} parent=27 // pred_region
        %s353 = smul.u32 2, %s13
      $region32: #{tpu_custom_call.1} parent=27 // pred_fallthru
        _
    $region28: #{tpu_custom_call.1} parent=5 // pred_fallthru
      _
    %p354 = scmp.le.s32.totalorder 2, %s8
    // Predicated region
    $region33: #{tpu_custom_call.1} parent=5 // pred_check
      %p355 = pneg %p354
    $region34: #{tpu_custom_call.1} parent=5 // pred_check_branch
      %357 = sbr.rel (%p355) target = $region36
    $region35: #{tpu_custom_call.1} parent=5 // pred_region
      %s358 = ssub.s32 %s8, 2
      // Predicated region
      $region37: #{tpu_custom_call.1} parent=35 // pred_check
        %p359 = pneg %p84
      $region38: #{tpu_custom_call.1} parent=35 // pred_check_branch
        %361 = sbr.rel (%p359) target = $region40
      $region39: #{tpu_custom_call.1} parent=35 // pred_region
        %s362 = smul.u32 2, %s14
        %p363 = scmp.lt.s32.totalorder %s362, 3
        %s364 = scalar_select %p363, %s362, 3
        %s365 = smul.addr %s364, 8
        %s366 = scalar_lea.vmem %s2, %s365
      $region40: #{tpu_custom_call.1} parent=35 // pred_fallthru
        _
    $region36: #{tpu_custom_call.1} parent=5 // pred_fallthru
      _
  $region6: #{tpu_custom_call.1} parent=0 // loop_footer
    %s12 = sadd.s32 1, %s8
  $region7: #{tpu_custom_call.1} parent=0 // loop_footer_branch
    %7 = sbr.rel target = $region3
  $region8: #{tpu_custom_call.1} parent=0 // loop_exit
    _

</llo_original>
